<compile_context>
chip_gen: v7x
topology: tpu7x:2x2x1
jax: 0.10.0
libtpu: 0.0.40
codegen_flags: <defaults>
</compile_context>

<pallas_src>
import functools

import jax
import jax.numpy as jnp
from jax.experimental import pallas as pl
from jax.experimental.pallas import tpu as pltpu


_TARGET_BLOCK_BYTES = 4 * 1024 * 1024  # per input block; x2 when double-buffered


# ---------------------------------------------------------------------------
# Kernels
# ---------------------------------------------------------------------------
def _mean_std_full_kernel(x_ref, mean_ref, std_ref, *, n):
    """Fast path: whole spatial extent in one block, exact two-pass mean/var.

    x_ref:    (rt, n) input block (rows = flattened batch*channel)
    mean_ref: (1, rt) lane-dense output block
    std_ref:  (1, rt) lane-dense output block
    """
    x = x_ref[...].astype(jnp.float32)                      # (rt, n)
    rt = x.shape[0]
    mean = jnp.sum(x, axis=-1, keepdims=True) * jnp.float32(1.0 / n)
    d = x - mean
    # Unbiased variance (N-1), matching torch.Tensor.std default.
    # N == 1 gives 0/0 -> NaN, exactly like torch.
    var = jnp.sum(d * d, axis=-1, keepdims=True) / jnp.float32(n - 1)
    std = jnp.sqrt(var)
    mean_ref[...] = mean.reshape(1, rt).astype(mean_ref.dtype)
    std_ref[...] = std.reshape(1, rt).astype(std_ref.dtype)


def _mean_std_stream_kernel(x_ref, mean_ref, std_ref, off_ref, sum_ref,
                            sumsq_ref, *, n, hw_tile, n_spatial):
    """Streaming path: spatial axis is a grid reduction axis ("arbitrary").

    x_ref:    (rt, hw_tile) input block
    mean_ref: (1, rt) lane-dense output block (written on the last tile only)
    std_ref:  (1, rt) lane-dense output block
    off_ref, sum_ref, sumsq_ref: (rt, 1) f32 VMEM scratch, persistent across
        the innermost spatial grid axis.
    """
    k = pl.program_id(1)
    x = x_ref[...].astype(jnp.float32)                      # (rt, hw_tile)

    @pl.when(k == 0)
    def _init():
        # Per-row shift (first spatial element) -> numerically stable
        # single-pass sum / sum-of-squares.
        off_ref[...] = x[:, :1]
        sum_ref[...] = jnp.zeros_like(sum_ref)
        sumsq_ref[...] = jnp.zeros_like(sumsq_ref)

    def accumulate(xc):
        sum_ref[...] += jnp.sum(xc, axis=-1, keepdims=True)        # (rt, 1)
        sumsq_ref[...] += jnp.sum(xc * xc, axis=-1, keepdims=True)

    needs_mask = (n % hw_tile) != 0  # static Python check at trace time

    if needs_mask and n_spatial > 1:
        # Fast (unmasked) path for all full tiles; mask only the tail tile.
        @pl.when(k < n_spatial - 1)
        def _full_tiles():
            accumulate(x - off_ref[...])

        @pl.when(k == n_spatial - 1)
        def _tail_tile():
            col = jax.lax.broadcasted_iota(jnp.int32, (1, hw_tile), 1)
            valid = col < (n - (n_spatial - 1) * hw_tile)
            # Select (not multiply): OOB lanes of the partial boundary block
            # hold unspecified data and must never reach the accumulators.
            accumulate(jnp.where(valid, x - off_ref[...], 0.0))
    elif needs_mask:
        col = jax.lax.broadcasted_iota(jnp.int32, (1, hw_tile), 1)
        accumulate(jnp.where(col < n, x - off_ref[...], 0.0))
    else:
        accumulate(x - off_ref[...])

    @pl.when(k == n_spatial - 1)
    def _finalize():
        rt = sum_ref.shape[0]
        nf = jnp.float32(n)
        s = sum_ref[...]                                     # (rt, 1)
        mean_shifted = s / nf
        mean = off_ref[...] + mean_shifted
        # Unbiased variance (N-1), matching torch.Tensor.std default.
        var = (sumsq_ref[...] - s * mean_shifted) / jnp.float32(n - 1)
        var = jnp.maximum(var, 0.0)
        std = jnp.sqrt(var)
        mean_ref[...] = mean.reshape(1, rt).astype(mean_ref.dtype)
        std_ref[...] = std.reshape(1, rt).astype(std_ref.dtype)


# ---------------------------------------------------------------------------
# Tiling policy
# ---------------------------------------------------------------------------
def _choose_tiles(R, HW, itemsize, target_block_bytes):
    """Returns (row_tile, hw_tile).  hw_tile == HW selects the fast path."""
    row_bytes = HW * itemsize

    # Candidate row tile for the full-spatial (single-pass) path.
    if R <= 128:
        rt_full = R                                   # full dim -> always legal
    else:
        rt_full = (target_block_bytes // max(row_bytes, 1)) // 128 * 128
        rt_full = max(128, min(rt_full, R))
        if rt_full >= R:
            # Keep >= 2 steps on the parallel axis so both v7x TCs get work.
            rt_full = max(128, ((R + 1) // 2) // 128 * 128)

    if rt_full * row_bytes <= target_block_bytes:
        return rt_full, HW                            # fast path

    # Streaming path: bounded rows, 128-aligned spatial tiles (tail masked).
    rt = R if R <= 128 else 128
    hw_tile = (target_block_bytes // (rt * itemsize)) // 128 * 128
    hw_tile = max(128, min(hw_tile, HW))
    return rt, hw_tile


# ---------------------------------------------------------------------------
# Public wrapper (== MeanStdCalculator.forward)
# ---------------------------------------------------------------------------
def mean_std_calculator(feature_maps: jax.Array, *,
                        target_block_bytes: int = _TARGET_BLOCK_BYTES):
    """Pallas equivalent of MeanStdCalculator.forward.

    Args:
      feature_maps: (B, C, H, W) array (f32 or bf16).
    Returns:
      (mean, std): each of shape (B, C, 1, 1), dtype == input dtype.
    """
    B, C, H, W = feature_maps.shape
    dtype = feature_maps.dtype
    R = B * C
    hw = H * W
    itemsize = jnp.dtype(dtype).itemsize

    # Free reshape for contiguous NCHW: rows = (batch, channel), lanes = space.
    x = feature_maps.reshape(R, hw)

    rt, hw_tile = _choose_tiles(R, hw, itemsize, target_block_bytes)
    n_rows = pl.cdiv(R, rt)

    out_shape = (jax.ShapeDtypeStruct((1, R), dtype),
                 jax.ShapeDtypeStruct((1, R), dtype))

    if hw_tile == hw:
        # Fast path: no spatial grid axis, no accumulators, no masking.
        mean, std = pl.pallas_call(
            functools.partial(_mean_std_full_kernel, n=hw),
            out_shape=out_shape,
            grid_spec=pltpu.PrefetchScalarGridSpec(
                num_scalar_prefetch=0,
                grid=(n_rows,),
                in_specs=[pl.BlockSpec((rt, hw), lambda r: (r, 0))],
                out_specs=[
                    pl.BlockSpec((1, rt), lambda r: (0, r)),
                    pl.BlockSpec((1, rt), lambda r: (0, r)),
                ],
            ),
            compiler_params=pltpu.CompilerParams(
                dimension_semantics=("parallel",)),
        )(x)
    else:
        n_spatial = pl.cdiv(hw, hw_tile)
        mean, std = pl.pallas_call(
            functools.partial(_mean_std_stream_kernel, n=hw,
                              hw_tile=hw_tile, n_spatial=n_spatial),
            out_shape=out_shape,
            grid_spec=pltpu.PrefetchScalarGridSpec(
                num_scalar_prefetch=0,
                grid=(n_rows, n_spatial),
                in_specs=[pl.BlockSpec((rt, hw_tile), lambda r, k: (r, k))],
                out_specs=[
                    pl.BlockSpec((1, rt), lambda r, k: (0, r)),
                    pl.BlockSpec((1, rt), lambda r, k: (0, r)),
                ],
                scratch_shapes=[
                    pltpu.VMEM((rt, 1), jnp.float32),   # per-row shift
                    pltpu.VMEM((rt, 1), jnp.float32),   # running sum
                    pltpu.VMEM((rt, 1), jnp.float32),   # running sum of squares
                ],
            ),
            compiler_params=pltpu.CompilerParams(
                dimension_semantics=("parallel", "arbitrary")),
        )(x)

    return mean.reshape(B, C, 1, 1), std.reshape(B, C, 1, 1)


# ---------------------------------------------------------------------------
# Pure-JAX reference and tests
# ---------------------------------------------------------------------------
def _reference(x):
    B, C = x.shape[:2]
    flat = x.reshape(B, C, -1).astype(jnp.float32)
    ref_mean = flat.mean(axis=2).reshape(B, C, 1, 1)
    ref_std = flat.std(axis=2, ddof=1).reshape(B, C, 1, 1)
    return ref_mean.astype(x.dtype), ref_std.astype(x.dtype)


if __name__ == "__main__":
    key = jax.random.PRNGKey(0)
    k1, k2, k3 = jax.random.split(key, 3)

    # 1) Small NCHW feature maps (nominal module use): fast path, rt = B*C = 8.
    x1 = jax.random.normal(k1, (2, 4, 16, 16), dtype=jnp.float32) + 3.0
    m1, s1 = mean_std_calculator(x1)
    jax.block_until_ready((m1, s1))
    rm1, rs1 = _reference(x1)
    assert m1.shape == (2, 4, 1, 1) and s1.shape == (2, 4, 1, 1)
    assert jnp.allclose(m1, rm1, atol=1e-4, rtol=1e-4)
    assert jnp.allclose(s1, rs1, atol=1e-4, rtol=1e-4)

    # 2) More channels: 128-row tiles, 2 parallel grid steps (v7x megacore),
    #    partial boundary row block (192 rows -> 128 + 64).
    x2 = jax.random.normal(k2, (2, 96, 48, 48), dtype=jnp.float32) * 0.5 + 5.0
    m2, s2 = mean_std_calculator(x2)
    jax.block_until_ready((m2, s2))
    rm2, rs2 = _reference(x2)
    assert jnp.allclose(m2, rm2, atol=1e-4, rtol=1e-4)
    assert jnp.allclose(s2, rs2, atol=1e-4, rtol=1e-4)

    # 3) Streaming path (spatial reduction grid axis + tail-tile mask),
    #    forced via a small block budget so the test input stays tiny.
    x3 = jax.random.normal(k3, (2, 4, 40, 40), dtype=jnp.float32) * 2.0 - 1.0
    m3, s3 = mean_std_calculator(x3, target_block_bytes=32 * 1024)
    jax.block_until_ready((m3, s3))
    rm3, rs3 = _reference(x3)
    assert jnp.allclose(m3, rm3, atol=1e-4, rtol=1e-4)
    assert jnp.allclose(s3, rs3, atol=1e-4, rtol=1e-4)

    print("KERNEL_OK")
</pallas_src>

<mosaic_0001>
module attributes {stable_mosaic.version = 11 : i64} {
  func.func @_mean_std_full_kernel(%arg0: i32, %arg1: memref<8x256xf32, #tpu.memory_space<vmem>>, %arg2: memref<1x8xf32, #tpu.memory_space<vmem>>, %arg3: memref<1x8xf32, #tpu.memory_space<vmem>>) attributes {dimension_semantics = [#tpu.dimension_semantics<parallel>], iteration_bounds = array<i64: 1>, scalar_prefetch = 0 : i64, scratch_operands = 0 : i64, tpu.core_type = #tpu.core_type<tc>, window_params = [{transform_indices = @transform_0, window_bounds = array<i64: 8, 256>}, {transform_indices = @transform_1, window_bounds = array<i64: 1, 8>}, {transform_indices = @transform_2, window_bounds = array<i64: 1, 8>}]} {
    %c0 = arith.constant 0 : index
    %c0_0 = arith.constant 0 : index
    %0 = vector.load %arg1[%c0, %c0_0] : memref<8x256xf32, #tpu.memory_space<vmem>>, vector<8x256xf32>
    %cst = arith.constant dense<0.000000e+00> : vector<8xf32>
    %1 = vector.multi_reduction <add>, %0, %cst [1] : vector<8x256xf32> to vector<8xf32>
    %2 = vector.shape_cast %1 : vector<8xf32> to vector<8x1xf32>
    %cst_1 = arith.constant 3.906250e-03 : f32
    %3 = vector.broadcast %cst_1 : f32 to vector<8x1xf32>
    %4 = arith.mulf %2, %3 : vector<8x1xf32>
    %5 = vector.broadcast %4 : vector<8x1xf32> to vector<8x256xf32>
    %6 = arith.subf %0, %5 : vector<8x256xf32>
    %7 = arith.mulf %6, %6 : vector<8x256xf32>
    %cst_2 = arith.constant dense<0.000000e+00> : vector<8xf32>
    %8 = vector.multi_reduction <add>, %7, %cst_2 [1] : vector<8x256xf32> to vector<8xf32>
    %9 = vector.shape_cast %8 : vector<8xf32> to vector<8x1xf32>
    %cst_3 = arith.constant 2.550000e+02 : f32
    %10 = vector.broadcast %cst_3 : f32 to vector<8x1xf32>
    %11 = arith.divf %9, %10 : vector<8x1xf32>
    %12 = math.sqrt %11 : vector<8x1xf32>
    %13 = vector.shape_cast %4 : vector<8x1xf32> to vector<1x8xf32>
    %c0_4 = arith.constant 0 : index
    %c0_5 = arith.constant 0 : index
    %14 = vector.load %arg2[%c0_4, %c0_5] : memref<1x8xf32, #tpu.memory_space<vmem>>, vector<1x8xf32>
    tpu.vector_store %arg2[%c0_4, %c0_5], %13 {strides = array<i32>} : memref<1x8xf32, #tpu.memory_space<vmem>>, vector<1x8xf32>,
    %15 = vector.shape_cast %12 : vector<8x1xf32> to vector<1x8xf32>
    %c0_6 = arith.constant 0 : index
    %c0_7 = arith.constant 0 : index
    %16 = vector.load %arg3[%c0_6, %c0_7] : memref<1x8xf32, #tpu.memory_space<vmem>>, vector<1x8xf32>
    tpu.vector_store %arg3[%c0_6, %c0_7], %15 {strides = array<i32>} : memref<1x8xf32, #tpu.memory_space<vmem>>, vector<1x8xf32>,
    return
  }
  func.func @transform_0(%arg0: i32) -> (i32, i32) {
    %c0_i32 = arith.constant 0 : i32
    %c0_i32_0 = arith.constant 0 : i32
    return %arg0, %c0_i32 : i32, i32
  }
  func.func @transform_1(%arg0: i32) -> (i32, i32) {
    %c0_i32 = arith.constant 0 : i32
    %c0_i32_0 = arith.constant 0 : i32
    return %c0_i32, %arg0 : i32, i32
  }
  func.func @transform_2(%arg0: i32) -> (i32, i32) {
    %c0_i32 = arith.constant 0 : i32
    %c0_i32_0 = arith.constant 0 : i32
    return %c0_i32, %arg0 : i32, i32
  }
}

</mosaic_0001>

<llo_original>
// kernel: tpu_custom_call.1
$region0: #{tpu_custom_call.1}
  #allocation0 [shape = 'u32[]', space=smem, size = 0x4, offset = 0x4, fixed_abs, tag = 'smem constant byte address 0x4 - core index']
  #allocation1 [shape = 'u32[144,128]{1,0:T(1,128)}', space=vmem, size = 0x12000, scoped, tag = 'internal scratch']
  %s0 = inlined_call_operand.hbm [shape: f32[8,256], index: 0, kind: input, shape index: {}]
  %s1 = inlined_call_operand.hbm [shape: f32[1,8], index: 1, kind: output, shape index: {0}]
  %s2 = inlined_call_operand.hbm [shape: f32[1,8], index: 2, kind: output, shape index: {1}]
  %3 = xla_tuple %s1, %s2
  %s4 = sld [smem:[#allocation0]]
  $region26: #{tpu_custom_call.1} parent=0
    _
  %s6 = ssub.s32 1, %s4
  %s7 = scalar_select 0, %s6, %s4
  $region1: #{tpu_custom_call.1} parent=0
    #allocation2 [shape = 'u8[8192]{0}', space=vmem, size = 0x2000, scoped, tag = 'input window, operand 0, single buffered']
    #allocation3 [shape = 's32[1]{0}', space=sflag, size = 0x4, scoped, tag = 'scoped memory for tpu_custom_call.1']
    #allocation4 [shape = 's32[1]{0}', space=sflag, size = 0x4, scoped, tag = 'scoped memory for tpu_custom_call.1']
    #allocation5 [shape = 'u8[512]{0}', space=vmem, size = 0x400, scoped, tag = 'output window, operand 0, single buffered']
    #allocation6 [shape = 'u8[512]{0}', space=vmem, size = 0x400, scoped, tag = 'output window, operand 1, single buffered']
    #allocation7 [shape = 's32[1]{0}', space=sflag, size = 0x4, scoped, tag = 'scoped memory for tpu_custom_call.1']
    %8 = vsyncpa [#allocation3], 0
    %9 = vsyncpa [#allocation4], 0
    %10 = vsyncpa [#allocation7], 0
    // Predicated region
    $region2: #{tpu_custom_call.1} parent=1 // pred_check
      _
    $region3: #{tpu_custom_call.1} parent=1 // pred_check_branch
      %12 = sbr.rel (0) target = $region5
    $region4: #{tpu_custom_call.1} parent=1 // pred_region
      %s14 = ssub.s32 256, 256
      %15 = vsyncadd [#allocation3], %s14
      %s17 = sshll.u32 [#allocation2], 4
      %s18 = int_to_ptr.vmem [resolvable:$true] %s17
      %20 = dma.hbm_to_vmem [thread:$0]  %s0, 256, %s18, [#allocation3]
    $region5: #{tpu_custom_call.1} parent=1 // pred_fallthru
      _
    // Predicated region
    $region6: #{tpu_custom_call.1} parent=1 // pred_check
      _
    $region7: #{tpu_custom_call.1} parent=1 // pred_check_branch
      %22 = sbr.rel (0) target = $region9
    $region8: #{tpu_custom_call.1} parent=1 // pred_region
      %23 = dma.done [#allocation3], 256
    $region9: #{tpu_custom_call.1} parent=1 // pred_fallthru
      _
    %v24 = vld [vmem:[#allocation2] sm:$0xff]
    %v25 = vld [vmem:[#allocation2 + $0x8] sm:$0xff]
    %v26 = vadd.f32 %v24, %v25
    %27 = vadd.xlane.f32.xlu0 %v26
    %v28 = vpop.xlane.xlu0 %27
    %v29 = vmul.f32 %v28, 0.00390625
    %v30 = vsub.f32 %v24, %v29
    %v31 = vsub.f32 %v25, %v29
    %v32 = vmul.f32 %v30, %v30
    %v33 = vmul.f32 %v31, %v31
    %v34 = vadd.f32 %v32, %v33
    %35 = vadd.xlane.f32.xlu0 %v34
    %v36 = vpop.xlane.xlu0 %35
    %v37 = vrcp.pop 255.0
    %v38 = vmul.f32 %v36, %v37
    %v39 = vrsqrt.pop %v38
    %v40 = vmul.f32 %v38, %v39
    %vm41 = vcmp.eq.f32.partialorder %v38, inf
    %v42 = vsel %vm41, %v38, %v40
    %vm43 = vcmp.eq.f32.partialorder %v38, 0.0
    %v44 = vand.u32 %v38, 2147483648
    %v45 = vsel %vm43, %v44, %v42
    %v47 = vlaneseq
    %v48 = vand.u32 %v47, 127
    %v49 = vlaneseq
    %v50 = vshrl.u32 %v49, 7
    %v51 = vsub.s32 %v48, %v50
    %v52 = vrot.slane %v29, %v51
    %vm54 = vcmask 57344
    %55 = vst.msk [vmem:[#allocation5] sm:$0x1] %vm54, %v52
    %v57 = vlaneseq
    %v58 = vshrl.u32 %v57, 7
    %v59 = vsub.s32 %v48, %v58
    %v60 = vrot.slane %v45, %v59
    %62 = vst.msk [vmem:[#allocation6] sm:$0x1] %vm54, %v60
    // Predicated region
    $region10: #{tpu_custom_call.1} parent=1 // pred_check
      _
    $region11: #{tpu_custom_call.1} parent=1 // pred_check_branch
      %64 = sbr.rel (0) target = $region13
    $region12: #{tpu_custom_call.1} parent=1 // pred_region
      %s66 = ssub.s32 16, 16
      %67 = vsyncadd [#allocation4], %s66
      %s69 = sshll.u32 [#allocation5], 4
      %s70 = int_to_ptr.vmem [resolvable:$true] %s69
      %72 = dma.vmem_to_hbm [thread:$0]  %s70, 16, %s1, [#allocation4]
    $region13: #{tpu_custom_call.1} parent=1 // pred_fallthru
      _
    // Predicated region
    $region14: #{tpu_custom_call.1} parent=1 // pred_check
      _
    $region15: #{tpu_custom_call.1} parent=1 // pred_check_branch
      %74 = sbr.rel (0) target = $region17
    $region16: #{tpu_custom_call.1} parent=1 // pred_region
      %s76 = ssub.s32 16, 16
      %77 = vsyncadd [#allocation7], %s76
      %s79 = sshll.u32 [#allocation6], 4
      %s80 = int_to_ptr.vmem [resolvable:$true] %s79
      %82 = dma.vmem_to_hbm [thread:$0]  %s80, 16, %s2, [#allocation7]
    $region17: #{tpu_custom_call.1} parent=1 // pred_fallthru
      _
    // Predicated region
    $region18: #{tpu_custom_call.1} parent=1 // pred_check
      _
    $region19: #{tpu_custom_call.1} parent=1 // pred_check_branch
      %84 = sbr.rel (0) target = $region21
    $region20: #{tpu_custom_call.1} parent=1 // pred_region
      %85 = dma.done [#allocation4], 16
    $region21: #{tpu_custom_call.1} parent=1 // pred_fallthru
      _
    // Predicated region
    $region22: #{tpu_custom_call.1} parent=1 // pred_check
      _
    $region23: #{tpu_custom_call.1} parent=1 // pred_check_branch
      %87 = sbr.rel (0) target = $region25
    $region24: #{tpu_custom_call.1} parent=1 // pred_region
      %88 = dma.done [#allocation7], 16
    $region25: #{tpu_custom_call.1} parent=1 // pred_fallthru
      _
    %89 = vsyncpa [#allocation3], 1
    %90 = vsyncpa [#allocation4], 1
    %91 = vsyncpa [#allocation7], 1

</llo_original>
